<compile_context>
chip_gen: v5e
topology: v5e:2x2
jax: 0.10.0
libtpu: 0.0.40
codegen_flags: <defaults>
</compile_context>

<pallas_src>
import functools

import numpy as np
import jax
import jax.numpy as jnp
from jax import lax
from jax.experimental import pallas as pl
from jax.experimental.pallas import tpu as pltpu


def _cdiv(a, b):
    return -(-a // b)


# --------------------------- in-kernel mask raster ------------------------- #
def _mask_block(scal_ref, sample, tile, *, shape, w, off_h, off_w,
                use_h, use_w, mode, flat_layout, bc, rows):
    """Rasterize the GridMask pattern for one (1, 1, rows, bc) spatial block
    from the per-sample scalars held in SMEM (no HBM mask traffic)."""
    d = scal_ref[sample, 0]
    st_h = scal_ref[sample, 1]
    st_w = scal_ref[sample, 2]
    band = scal_ref[sample, 3]            # band width `l`
    lim_h = scal_ref[sample, 4]           # st_h + d * (hh // d)
    lim_w = scal_ref[sample, 5]           # st_w + d * (ww // d)

    r_idx = lax.broadcasted_iota(jnp.int32, shape, 2) + tile * rows
    c_idx = lax.broadcasted_iota(jnp.int32, shape, 3)
    if flat_layout:
        # Spatial view is (H*W // 128, 128): recover (y, x) from the flat index
        # with a float divmod + one correction step (exact, avoids relying on
        # vector integer division lowering).
        flat = r_idx * bc + c_idx
        y = jnp.floor((flat.astype(jnp.float32) + 0.5) * (1.0 / w)).astype(jnp.int32)
        xc = flat - y * w
        y = jnp.where(xc < 0, y - 1, y)
        xc = jnp.where(xc < 0, xc + w, xc)
        y = jnp.where(xc >= w, y + 1, y)
        xc = jnp.where(xc >= w, xc - w, xc)
    else:
        y, xc = r_idx, c_idx
    yy = y + off_h                        # coords in the (hh, ww) frame
    xx = xc + off_w

    d_f = d.astype(jnp.float32)
    l_f = band.astype(jnp.float32)

    def banded(p, st, lim):
        rp = p - st
        rp_f = rp.astype(jnp.float32)
        q = jnp.floor((rp_f + 0.5) / d_f)       # float mod with correction: exact
        rem = rp_f - q * d_f
        rem = jnp.where(rem < 0.0, rem + d_f, rem)
        rem = jnp.where(rem >= d_f, rem - d_f, rem)
        return (rp >= 0) & (rem < l_f) & (p < lim)

    covered = jnp.zeros(shape, dtype=jnp.bool_)
    if use_h:
        covered = covered | banded(yy, st_h, lim_h)
    if use_w:
        covered = covered | banded(xx, st_w, lim_w)
    if mode == 1:
        return covered.astype(jnp.float32)
    return (~covered).astype(jnp.float32)


# ------------------------------ Pallas kernels ----------------------------- #
def _grid_mask_kernel(scal_ref, x_ref, o_ref, *, masked_value, mask_kw):
    t = pl.program_id(0)
    i = pl.program_id(1)
    m = _mask_block(scal_ref, i, t, **mask_kw)          # (1, 1, rows, bc)
    x = x_ref[...].astype(jnp.float32)                  # (1, C, rows, bc)
    out = x * m
    if masked_value != 0.0:                             # static Python branch
        out = out + (1.0 - m) * masked_value
    o_ref[...] = out.astype(o_ref.dtype)


def _grid_mask_offset_kernel(scal_ref, x_ref, f_ref, o_ref, *, mask_kw):
    t = pl.program_id(0)
    i = pl.program_id(1)
    m = _mask_block(scal_ref, i, t, **mask_kw)
    x = x_ref[...].astype(jnp.float32)
    f = f_ref[...].astype(jnp.float32)                  # (1, 1, rows, bc)
    o_ref[...] = (x * m + (1.0 - m) * f).astype(o_ref.dtype)


# ------------------------------- wrapper ----------------------------------- #
def _choose_rows(R, c, bc, itemsize, n, target_bytes=4 * 1024 * 1024):
    """Rows of the (R, bc) spatial view per block: a multiple of 8 (or the full
    extent) targeting ~target_bytes per x block; exact divisors of R preferred
    so no partially-out-of-bounds tail block is needed."""
    max_rows = max(target_bytes // (c * bc * itemsize), 1)
    if R <= 8 or R <= max_rows:
        rows = R
    else:
        rows = None
        top = max((min(max_rows, R) // 8) * 8, 8)
        for cand in range(top, 7, -8):                  # prefer exact divisors
            if R % cand == 0:
                rows = cand
                break
        if rows is None:                                # partial tail block
            rows = top
    # v7x megacore: make sure there are >= 2 grid steps when the input is big
    # enough to split legally.
    if n * _cdiv(R, rows) < 2 and R > 8:
        rows = max(8, _cdiv(_cdiv(R, 2), 8) * 8)
    return rows


def apply_grid_mask(x, scalars, *, use_h, use_w, mode, masked_value=0.0,
                    fill=None, donate=False, target_block_bytes=4 * 1024 * 1024):
    """x: (N, C, H, W); scalars: (N, 6) int32 [d, st_h, st_w, l, lim_h, lim_w];
    fill: optional (H, W) float map for the offset=True path."""
    n, c, h, w = x.shape
    hw = h * w
    itemsize = jnp.dtype(x.dtype).itemsize
    hh, ww = int(1.5 * h), int(1.5 * w)
    off_h, off_w = (hh - h) // 2, (ww - w) // 2

    # Lane-dense (..., R, 128) spatial view when possible; otherwise the natural
    # (..., H, W) view (bounded blocks -- no giant fallback tile).
    flat_layout = (hw % 128 == 0)
    bc = 128 if flat_layout else w
    R = hw // bc
    rows = _choose_rows(R, c, bc, itemsize, n, target_block_bytes)
    grid = (_cdiv(R, rows), n)                          # sample axis innermost

    xv = x.reshape(n, c, R, bc)
    mask_kw = dict(shape=(1, 1, rows, bc), w=w, off_h=off_h, off_w=off_w,
                   use_h=use_h, use_w=use_w, mode=mode,
                   flat_layout=flat_layout, bc=bc, rows=rows)

    in_specs = [pl.BlockSpec((1, c, rows, bc), lambda t, i, s: (i, 0, t, 0))]
    operands = [scalars, xv]
    if fill is not None:
        # Fill block index only depends on the slow spatial axis, so with the
        # sample axis innermost it is fetched once per spatial tile (not per N).
        in_specs.append(pl.BlockSpec((1, 1, rows, bc),
                                     lambda t, i, s: (0, 0, t, 0)))
        operands.append(fill.reshape(1, 1, R, bc))
        kernel = functools.partial(_grid_mask_offset_kernel, mask_kw=mask_kw)
    else:
        kernel = functools.partial(_grid_mask_kernel,
                                   masked_value=float(masked_value),
                                   mask_kw=mask_kw)

    out = pl.pallas_call(
        kernel,
        out_shape=jax.ShapeDtypeStruct((n, c, R, bc), x.dtype),
        grid_spec=pltpu.PrefetchScalarGridSpec(
            num_scalar_prefetch=1,
            grid=grid,
            in_specs=in_specs,
            out_specs=pl.BlockSpec((1, c, rows, bc), lambda t, i, s: (i, 0, t, 0)),
        ),
        compiler_params=pltpu.CompilerParams(
            dimension_semantics=("parallel", "parallel"),
            vmem_limit_bytes=32 * 1024 * 1024),
        # Indices include the scalar-prefetch operand, so x is input 1.  Only
        # useful when the caller jits and donates x (avoids a second HBM copy).
        input_output_aliases=({1: 0} if donate else {}),
    )(*operands)
    return out.reshape(n, c, h, w)


# ------------------------------ Module glue -------------------------------- #
class CustomGridMask:
    def __init__(self, use_h, use_w, rotate=1, offset=False,
                 ratio_range=(0.6, 0.95), mode=0, prob=1.0,
                 interv_ratio=0.5, masked_value=0):
        self.use_h = use_h
        self.use_w = use_w
        self.rotate = rotate
        self.offset = offset
        self.ratio_range = ratio_range
        self.mode = mode
        self.st_prob = prob
        self.prob = prob
        self.interv_ratio = interv_ratio
        self.masked_value = masked_value
        self.training = True

    def set_prob(self, epoch, max_epoch):
        self.prob = self.st_prob * epoch / max_epoch

    def _draw_scalars(self, n, h, w):
        """Per-sample GridMask parameters, drawn with the exact numpy RNG call
        sequence of the reference (d, ratio, st_h, st_w, r per sample)."""
        hh, ww = int(1.5 * h), int(1.5 * w)
        scal = np.zeros((n, 6), np.int32)
        for k in range(n):
            d = np.random.randint(2, max(int(h * self.interv_ratio), 3))
            ratio = np.random.uniform(self.ratio_range[0], self.ratio_range[1])
            self.l = min(max(int(d * ratio + 0.5), 1), d - 1)
            st_h = np.random.randint(d)
            st_w = np.random.randint(d)
            r = np.random.randint(self.rotate)
            # TODO(synk): PIL Image.rotate(r) has no Pallas/JAX equivalent;
            # with the default rotate=1 we always have r == 0 (identity).
            assert r == 0, "only rotate=1 (identity rotation) supported"
            scal[k] = (d, st_h, st_w, self.l,
                       st_h + d * (hh // d), st_w + d * (ww // d))
        return scal

    def forward(self, x):
        if np.random.rand() > self.prob or not self.training:
            return x
        n, c, h, w = x.shape
        scalars = jnp.asarray(self._draw_scalars(n, h, w))
        if self.offset:
            fill = (2.0 * (np.random.rand(h, w) - 0.5)).astype(np.float32)
            return apply_grid_mask(x, scalars, use_h=self.use_h,
                                   use_w=self.use_w, mode=self.mode,
                                   fill=jnp.asarray(fill))
        return apply_grid_mask(x, scalars, use_h=self.use_h, use_w=self.use_w,
                               mode=self.mode,
                               masked_value=float(self.masked_value))

    __call__ = forward


# ------------------------------ Reference ----------------------------------- #
def _reference_mask(h, w, *, use_h, use_w, mode, interv_ratio, ratio_range, rotate):
    """Host rasterization mirroring the PyTorch reference (r == 0 identity)."""
    hh, ww = int(1.5 * h), int(1.5 * w)
    d = np.random.randint(2, max(int(h * interv_ratio), 3))
    ratio = np.random.uniform(ratio_range[0], ratio_range[1])
    l = min(max(int(d * ratio + 0.5), 1), d - 1)
    mask = np.ones((hh, ww), np.float32)
    st_h = np.random.randint(d)
    st_w = np.random.randint(d)
    if use_h:
        for i in range(hh // d):
            s = d * i + st_h
            t = min(s + l, hh)
            mask[s:t, :] *= 0
    if use_w:
        for i in range(ww // d):
            s = d * i + st_w
            t = min(s + l, ww)
            mask[:, s:t] *= 0
    _ = np.random.randint(rotate)                     # r draw (identity)
    mask = mask[(hh - h) // 2:(hh - h) // 2 + h,
                (ww - w) // 2:(ww - w) // 2 + w]
    if mode == 1:
        mask = 1.0 - mask
    return mask


def _reference_out(x_np, masks, fill, offset, masked_value):
    m = masks[:, None, :, :]
    if offset:
        return x_np * m + fill[None, None] * (1.0 - m)
    out = x_np * m
    if masked_value != 0:
        out = out + (1.0 - m) * masked_value
    return out


if __name__ == "__main__":
    def run_case(seed, x, *, offset=False, mode=0, masked_value=0):
        n, c, h, w = x.shape
        np.random.seed(seed)
        gm = CustomGridMask(use_h=True, use_w=True, rotate=1, offset=offset,
                            mode=mode, prob=1.0, masked_value=masked_value)
        out = jax.block_until_ready(gm(x))

        np.random.seed(seed)
        _ = np.random.rand()                          # prob draw
        masks = np.stack([_reference_mask(h, w, use_h=True, use_w=True,
                                          mode=mode, interv_ratio=0.5,
                                          ratio_range=(0.6, 0.95), rotate=1)
                          for _ in range(n)], axis=0)
        fill = None
        if offset:
            fill = (2.0 * (np.random.rand(h, w) - 0.5)).astype(np.float32)
        ref = _reference_out(np.asarray(x), masks, fill, offset, masked_value)
        np.testing.assert_allclose(np.asarray(out), ref, rtol=1e-6, atol=1e-6)

    key = jax.random.PRNGKey(0)
    k1, k2 = jax.random.split(key)
    x = jax.random.normal(k1, (2, 4, 16, 16), dtype=jnp.float32)      # H*W % 128 == 0
    x_odd = jax.random.normal(k2, (2, 3, 10, 12), dtype=jnp.float32)  # fallback layout

    run_case(0, x, offset=False, mode=0, masked_value=0)
    run_case(2, x, offset=False, mode=0, masked_value=2.5)
    run_case(1, x, offset=True, mode=1)
    run_case(3, x_odd, offset=False, mode=0, masked_value=0)

    print("KERNEL_OK")
</pallas_src>

<mosaic_0001>
module attributes {stable_mosaic.version = 11 : i64} {
  func.func @_grid_mask_kernel(%arg0: i32, %arg1: i32, %arg2: memref<2x6xi32, #tpu.memory_space<smem>>, %arg3: memref<1x4x2x128xf32, #tpu.memory_space<vmem>>, %arg4: memref<1x4x2x128xf32, #tpu.memory_space<vmem>>) attributes {dimension_semantics = [#tpu.dimension_semantics<parallel>, #tpu.dimension_semantics<parallel>], iteration_bounds = array<i64: 1, 2>, scalar_prefetch = 1 : i64, scratch_operands = 0 : i64, tpu.core_type = #tpu.core_type<tc>, window_params = [{transform_indices = @transform_0, window_bounds = array<i64: 1, 4, 2, 128>}, {transform_indices = @transform_1, window_bounds = array<i64: 1, 4, 2, 128>}]} {
    %0 = arith.index_cast %arg1 : i32 to index
    %c0 = arith.constant 0 : index
    %1 = memref.load %arg2[%0, %c0] : memref<2x6xi32, #tpu.memory_space<smem>>
    %2 = arith.index_cast %arg1 : i32 to index
    %c1 = arith.constant 1 : index
    %3 = memref.load %arg2[%2, %c1] : memref<2x6xi32, #tpu.memory_space<smem>>
    %4 = arith.index_cast %arg1 : i32 to index
    %c2 = arith.constant 2 : index
    %5 = memref.load %arg2[%4, %c2] : memref<2x6xi32, #tpu.memory_space<smem>>
    %6 = arith.index_cast %arg1 : i32 to index
    %c3 = arith.constant 3 : index
    %7 = memref.load %arg2[%6, %c3] : memref<2x6xi32, #tpu.memory_space<smem>>
    %8 = arith.index_cast %arg1 : i32 to index
    %c4 = arith.constant 4 : index
    %9 = memref.load %arg2[%8, %c4] : memref<2x6xi32, #tpu.memory_space<smem>>
    %10 = arith.index_cast %arg1 : i32 to index
    %c5 = arith.constant 5 : index
    %11 = memref.load %arg2[%10, %c5] : memref<2x6xi32, #tpu.memory_space<smem>>
    %12 = tpu.iota {dimensions = array<i32: 2>} : vector<1x1x2x128xi32>
    %c2_i32 = arith.constant 2 : i32
    %13 = arith.muli %arg0, %c2_i32 : i32
    %14 = vector.broadcast %13 : i32 to vector<1x1x2x128xi32>
    %15 = arith.addi %12, %14 : vector<1x1x2x128xi32>
    %16 = tpu.iota {dimensions = array<i32: 3>} : vector<1x1x2x128xi32>
    %c128_i32 = arith.constant 128 : i32
    %17 = vector.broadcast %c128_i32 : i32 to vector<1x1x2x128xi32>
    %18 = arith.muli %15, %17 : vector<1x1x2x128xi32>
    %19 = arith.addi %18, %16 : vector<1x1x2x128xi32>
    %20 = arith.sitofp %19 : vector<1x1x2x128xi32> to vector<1x1x2x128xf32>
    %cst = arith.constant 5.000000e-01 : f32
    %21 = vector.broadcast %cst : f32 to vector<1x1x2x128xf32>
    %22 = arith.addf %20, %21 : vector<1x1x2x128xf32>
    %cst_0 = arith.constant 6.250000e-02 : f32
    %23 = vector.broadcast %cst_0 : f32 to vector<1x1x2x128xf32>
    %24 = arith.mulf %22, %23 : vector<1x1x2x128xf32>
    %25 = math.floor %24 : vector<1x1x2x128xf32>
    %26 = arith.fptosi %25 : vector<1x1x2x128xf32> to vector<1x1x2x128xi32>
    %c16_i32 = arith.constant 16 : i32
    %27 = vector.broadcast %c16_i32 : i32 to vector<1x1x2x128xi32>
    %28 = arith.muli %26, %27 : vector<1x1x2x128xi32>
    %29 = arith.subi %19, %28 : vector<1x1x2x128xi32>
    %c0_i32 = arith.constant 0 : i32
    %30 = vector.broadcast %c0_i32 : i32 to vector<1x1x2x128xi32>
    %31 = arith.cmpi slt, %29, %30 : vector<1x1x2x128xi32>
    %c1_i32 = arith.constant 1 : i32
    %32 = vector.broadcast %c1_i32 : i32 to vector<1x1x2x128xi32>
    %33 = arith.subi %26, %32 : vector<1x1x2x128xi32>
    %34 = arith.select %31, %33, %26 : vector<1x1x2x128xi1>, vector<1x1x2x128xi32>
    %c0_i32_1 = arith.constant 0 : i32
    %35 = vector.broadcast %c0_i32_1 : i32 to vector<1x1x2x128xi32>
    %36 = arith.cmpi slt, %29, %35 : vector<1x1x2x128xi32>
    %c16_i32_2 = arith.constant 16 : i32
    %37 = vector.broadcast %c16_i32_2 : i32 to vector<1x1x2x128xi32>
    %38 = arith.addi %29, %37 : vector<1x1x2x128xi32>
    %39 = arith.select %36, %38, %29 : vector<1x1x2x128xi1>, vector<1x1x2x128xi32>
    %c16_i32_3 = arith.constant 16 : i32
    %40 = vector.broadcast %c16_i32_3 : i32 to vector<1x1x2x128xi32>
    %41 = arith.cmpi sge, %39, %40 : vector<1x1x2x128xi32>
    %c1_i32_4 = arith.constant 1 : i32
    %42 = vector.broadcast %c1_i32_4 : i32 to vector<1x1x2x128xi32>
    %43 = arith.addi %34, %42 : vector<1x1x2x128xi32>
    %44 = arith.select %41, %43, %34 : vector<1x1x2x128xi1>, vector<1x1x2x128xi32>
    %c16_i32_5 = arith.constant 16 : i32
    %45 = vector.broadcast %c16_i32_5 : i32 to vector<1x1x2x128xi32>
    %46 = arith.cmpi sge, %39, %45 : vector<1x1x2x128xi32>
    %c16_i32_6 = arith.constant 16 : i32
    %47 = vector.broadcast %c16_i32_6 : i32 to vector<1x1x2x128xi32>
    %48 = arith.subi %39, %47 : vector<1x1x2x128xi32>
    %49 = arith.select %46, %48, %39 : vector<1x1x2x128xi1>, vector<1x1x2x128xi32>
    %c4_i32 = arith.constant 4 : i32
    %50 = vector.broadcast %c4_i32 : i32 to vector<1x1x2x128xi32>
    %51 = arith.addi %44, %50 : vector<1x1x2x128xi32>
    %c4_i32_7 = arith.constant 4 : i32
    %52 = vector.broadcast %c4_i32_7 : i32 to vector<1x1x2x128xi32>
    %53 = arith.addi %49, %52 : vector<1x1x2x128xi32>
    %54 = arith.sitofp %1 : i32 to f32
    %55 = arith.sitofp %7 : i32 to f32
    %false = arith.constant false
    %56 = vector.broadcast %false : i1 to vector<1x1x2x128xi1>
    %57 = vector.broadcast %3 : i32 to vector<1x1x2x128xi32>
    %58 = arith.subi %51, %57 : vector<1x1x2x128xi32>
    %59 = arith.sitofp %58 : vector<1x1x2x128xi32> to vector<1x1x2x128xf32>
    %cst_8 = arith.constant 5.000000e-01 : f32
    %60 = vector.broadcast %cst_8 : f32 to vector<1x1x2x128xf32>
    %61 = arith.addf %59, %60 : vector<1x1x2x128xf32>
    %62 = vector.broadcast %54 : f32 to vector<1x1x2x128xf32>
    %63 = arith.divf %61, %62 : vector<1x1x2x128xf32>
    %64 = math.floor %63 : vector<1x1x2x128xf32>
    %65 = vector.broadcast %54 : f32 to vector<1x1x2x128xf32>
    %66 = arith.mulf %64, %65 : vector<1x1x2x128xf32>
    %67 = arith.subf %59, %66 : vector<1x1x2x128xf32>
    %cst_9 = arith.constant 0.000000e+00 : f32
    %68 = vector.broadcast %cst_9 : f32 to vector<1x1x2x128xf32>
    %69 = arith.cmpf olt, %67, %68 : vector<1x1x2x128xf32>
    %70 = vector.broadcast %54 : f32 to vector<1x1x2x128xf32>
    %71 = arith.addf %67, %70 : vector<1x1x2x128xf32>
    %72 = arith.select %69, %71, %67 : vector<1x1x2x128xi1>, vector<1x1x2x128xf32>
    %73 = vector.broadcast %54 : f32 to vector<1x1x2x128xf32>
    %74 = arith.cmpf oge, %72, %73 : vector<1x1x2x128xf32>
    %75 = vector.broadcast %54 : f32 to vector<1x1x2x128xf32>
    %76 = arith.subf %72, %75 : vector<1x1x2x128xf32>
    %77 = arith.select %74, %76, %72 : vector<1x1x2x128xi1>, vector<1x1x2x128xf32>
    %c0_i32_10 = arith.constant 0 : i32
    %78 = vector.broadcast %c0_i32_10 : i32 to vector<1x1x2x128xi32>
    %79 = arith.cmpi sge, %58, %78 : vector<1x1x2x128xi32>
    %80 = vector.broadcast %55 : f32 to vector<1x1x2x128xf32>
    %81 = arith.cmpf olt, %77, %80 : vector<1x1x2x128xf32>
    %82 = arith.andi %79, %81 : vector<1x1x2x128xi1>
    %83 = vector.broadcast %9 : i32 to vector<1x1x2x128xi32>
    %84 = arith.cmpi slt, %51, %83 : vector<1x1x2x128xi32>
    %85 = arith.andi %82, %84 : vector<1x1x2x128xi1>
    %86 = arith.ori %56, %85 : vector<1x1x2x128xi1>
    %87 = vector.broadcast %5 : i32 to vector<1x1x2x128xi32>
    %88 = arith.subi %53, %87 : vector<1x1x2x128xi32>
    %89 = arith.sitofp %88 : vector<1x1x2x128xi32> to vector<1x1x2x128xf32>
    %cst_11 = arith.constant 5.000000e-01 : f32
    %90 = vector.broadcast %cst_11 : f32 to vector<1x1x2x128xf32>
    %91 = arith.addf %89, %90 : vector<1x1x2x128xf32>
    %92 = vector.broadcast %54 : f32 to vector<1x1x2x128xf32>
    %93 = arith.divf %91, %92 : vector<1x1x2x128xf32>
    %94 = math.floor %93 : vector<1x1x2x128xf32>
    %95 = vector.broadcast %54 : f32 to vector<1x1x2x128xf32>
    %96 = arith.mulf %94, %95 : vector<1x1x2x128xf32>
    %97 = arith.subf %89, %96 : vector<1x1x2x128xf32>
    %cst_12 = arith.constant 0.000000e+00 : f32
    %98 = vector.broadcast %cst_12 : f32 to vector<1x1x2x128xf32>
    %99 = arith.cmpf olt, %97, %98 : vector<1x1x2x128xf32>
    %100 = vector.broadcast %54 : f32 to vector<1x1x2x128xf32>
    %101 = arith.addf %97, %100 : vector<1x1x2x128xf32>
    %102 = arith.select %99, %101, %97 : vector<1x1x2x128xi1>, vector<1x1x2x128xf32>
    %103 = vector.broadcast %54 : f32 to vector<1x1x2x128xf32>
    %104 = arith.cmpf oge, %102, %103 : vector<1x1x2x128xf32>
    %105 = vector.broadcast %54 : f32 to vector<1x1x2x128xf32>
    %106 = arith.subf %102, %105 : vector<1x1x2x128xf32>
    %107 = arith.select %104, %106, %102 : vector<1x1x2x128xi1>, vector<1x1x2x128xf32>
    %c0_i32_13 = arith.constant 0 : i32
    %108 = vector.broadcast %c0_i32_13 : i32 to vector<1x1x2x128xi32>
    %109 = arith.cmpi sge, %88, %108 : vector<1x1x2x128xi32>
    %110 = vector.broadcast %55 : f32 to vector<1x1x2x128xf32>
    %111 = arith.cmpf olt, %107, %110 : vector<1x1x2x128xf32>
    %112 = arith.andi %109, %111 : vector<1x1x2x128xi1>
    %113 = vector.broadcast %11 : i32 to vector<1x1x2x128xi32>
    %114 = arith.cmpi slt, %53, %113 : vector<1x1x2x128xi32>
    %115 = arith.andi %112, %114 : vector<1x1x2x128xi1>
    %116 = arith.ori %86, %115 : vector<1x1x2x128xi1>
    %cst_14 = arith.constant dense<true> : vector<1x1x2x128xi1>
    %117 = arith.xori %116, %cst_14 : vector<1x1x2x128xi1>
    %118 = arith.extui %117 : vector<1x1x2x128xi1> to vector<1x1x2x128xi32>
    %119 = arith.sitofp %118 : vector<1x1x2x128xi32> to vector<1x1x2x128xf32>
    %c0_15 = arith.constant 0 : index
    %c0_16 = arith.constant 0 : index
    %c0_17 = arith.constant 0 : index
    %c0_18 = arith.constant 0 : index
    %120 = vector.load %arg3[%c0_15, %c0_16, %c0_17, %c0_18] : memref<1x4x2x128xf32, #tpu.memory_space<vmem>>, vector<1x4x2x128xf32>
    %121 = vector.broadcast %119 : vector<1x1x2x128xf32> to vector<1x4x2x128xf32>
    %122 = arith.mulf %120, %121 : vector<1x4x2x128xf32>
    %c0_19 = arith.constant 0 : index
    %c0_20 = arith.constant 0 : index
    %c0_21 = arith.constant 0 : index
    %c0_22 = arith.constant 0 : index
    %123 = vector.load %arg4[%c0_19, %c0_20, %c0_21, %c0_22] : memref<1x4x2x128xf32, #tpu.memory_space<vmem>>, vector<1x4x2x128xf32>
    tpu.vector_store %arg4[%c0_19, %c0_20, %c0_21, %c0_22], %122 {strides = array<i32>} : memref<1x4x2x128xf32, #tpu.memory_space<vmem>>, vector<1x4x2x128xf32>,
    return
  }
  func.func @transform_0(%arg0: i32, %arg1: i32, %arg2: memref<2x6xi32, #tpu.memory_space<smem>>) -> (i32, i32, i32, i32) {
    %c0_i32 = arith.constant 0 : i32
    %c0_i32_0 = arith.constant 0 : i32
    %c0_i32_1 = arith.constant 0 : i32
    return %arg1, %c0_i32, %arg0, %c0_i32_0 : i32, i32, i32, i32
  }
  func.func @transform_1(%arg0: i32, %arg1: i32, %arg2: memref<2x6xi32, #tpu.memory_space<smem>>) -> (i32, i32, i32, i32) {
    %c0_i32 = arith.constant 0 : i32
    %c0_i32_0 = arith.constant 0 : i32
    %c0_i32_1 = arith.constant 0 : i32
    return %arg1, %c0_i32, %arg0, %c0_i32_0 : i32, i32, i32, i32
  }
}

</mosaic_0001>

<llo_original>
// kernel: tpu_custom_call.1
$region0: #{tpu_custom_call.1}
  #allocation0 [shape = 'u32[]', space=smem, size = 0x4, offset = 0x4, fixed_abs, tag = 'smem constant byte address 0x4 - core index']
  #allocation1 [shape = 'u32[72,128]{1,0:T(1,128)}', space=vmem, size = 0x9000, scoped, tag = 'internal scratch']
  #allocation2 [shape = 's32[1]{0}', space=sflag, size = 0x4, scoped, tag = 'scoped memory for tpu_custom_call.1']
  #allocation3 [shape = 'u8[1024]{0}', space=smem, size = 0x400, scoped, tag = 'prefetched SMEM operand 0']
  %s0 = inlined_call_operand.hbm [shape: s32[2,6], index: 0, kind: input, shape index: {}]
  %s1 = inlined_call_operand.hbm [shape: f32[2,4,2,128], index: 1, kind: input, shape index: {}]
  %s2 = inlined_call_operand.hbm [shape: f32[2,4,2,128], index: 2, kind: output, shape index: {}]
  %s3 = sld [smem:[#allocation0]]
  $region41: #{tpu_custom_call.1} parent=0
    _
  %s5 = ssub.s32 1, %s3
  %s6 = scalar_select 0, %s5, %s3
  %s8 = sshll.u32 %s0, 4
  %s9 = int_to_ptr.hbm [resolvable:$true] %s8
  %11 = dma.hbm_to_smem %s9, 32, [#allocation3], [#allocation2]
  %13 = dma.done [#allocation2], 32
  %14 = sfence
  $region1: #{tpu_custom_call.1} parent=0
    #allocation4 [shape = 'u8[8192]{0}', space=vmem, size = 0x2000, scoped, tag = 'input window, operand 1']
    #allocation5 [shape = 's32[2]{0}', space=sflag, size = 0x8, scoped, tag = 'scoped memory for tpu_custom_call.1']
    #allocation6 [shape = 's32[2]{0}', space=sflag, size = 0x8, scoped, tag = 'scoped memory for tpu_custom_call.1']
    #allocation7 [shape = 'u8[8192]{0}', space=vmem, size = 0x2000, scoped, tag = 'output window, operand 0']
    %15 = vsyncpa [#allocation5], 0
    %s16 = scalar_lea.sflag [#allocation5], 1
    %17 = vsyncpa %s16, 0
    %18 = vsyncpa [#allocation6], 0
    %s19 = scalar_lea.sflag [#allocation6], 1
    %20 = vsyncpa %s19, 0
    loop: start=0, step=1, limit=4
    $region2: #{tpu_custom_call.1} parent=1 // loop_pre_header
      _
    $region3: #{tpu_custom_call.1} parent=1 // loop_header
      %s22 = sphi 0, %s26
      %p23 = scmp.ge.s32.totalorder %s22, 4
      %s29 = sphi 0, %s41
      %s30 = sphi 0, %s37
      %s31 = sphi 0, %s29
      %s32 = sphi 0, %s30
      %s33 = sphi 0, %s31
      %s34 = sphi 0, %s32
      %s46 = sphi 0, %s48
      %s49 = sphi 0, %s46
      %s50 = sphi 0, %s49
      %s66 = sphi 0, %s50
      %s74 = sphi 0, %s76
      %s77 = sphi 0, %s74
      %s78 = sphi 0, %s77
      %s94 = sphi 0, %s78
    $region4: #{tpu_custom_call.1} parent=1 // loop_header_branch
      %25 = sbr.rel (%p23) target = $region8
    $region5: #{tpu_custom_call.1} parent=1 // loop_body
      %s27 = ssub.s32 %s22, 1
      %s28 = ssub.s32 %s22, 2
      %s35 = sadd.s32 1, %s30
      %p36 = scmp.ge.s32.totalorder %s35, 2
      %s37 = scalar_select %p36, 0, %s35
      %s38 = sadd.s32 1, %s29
      %s39 = scalar_select %p36, %s38, %s29
      %p40 = scmp.ge.s32.totalorder %s39, 1
      %s41 = scalar_select %p40, 0, %s39
      %s42 = ssub.s32 %s30, %s37
      %s43 = ssub.s32 %s29, %s41
      %s44 = sor.u32 %s42, %s43
      %p45 = scmp.eq.s32.totalorder %s44, 0
      %s47 = sadd.s32 %s46, 1
      %s48 = scalar_select %p45, %s46, %s47
      %p51 = pneg %p45
      %p52 = scmp.eq.s32.totalorder %s22, 1
      %p53 = por %p51, %p52
      %p54 = scmp.ne.s32.totalorder %s46, %s49
      %p55 = scmp.eq.s32.totalorder %s22, 0
      %p56 = por %p54, %p55
      %p57 = scmp.ne.s32.totalorder %s46, %s49
      %p58 = scmp.eq.s32.totalorder %s27, 1
      %p59 = por %p57, %p58
      %p60 = scmp.ne.s32.totalorder %s49, %s50
      %p61 = scmp.eq.s32.totalorder %s27, 0
      %p62 = por %p60, %p61
      %p63 = scmp.ne.s32.totalorder %s49, %s50
      %p64 = scmp.eq.s32.totalorder %s28, 1
      %p65 = por %p63, %p64
      %p67 = scmp.ne.s32.totalorder %s50, %s66
      %p68 = scmp.eq.s32.totalorder %s28, 0
      %p69 = por %p67, %p68
      %s70 = ssub.s32 %s30, %s37
      %s71 = ssub.s32 %s29, %s41
      %s72 = sor.u32 %s70, %s71
      %p73 = scmp.eq.s32.totalorder %s72, 0
      %s75 = sadd.s32 %s74, 1
      %s76 = scalar_select %p73, %s74, %s75
      %p79 = pneg %p73
      %p80 = scmp.eq.s32.totalorder %s22, 1
      %p81 = por %p79, %p80
      %p82 = scmp.ne.s32.totalorder %s74, %s77
      %p83 = scmp.eq.s32.totalorder %s22, 0
      %p84 = por %p82, %p83
      %p85 = scmp.ne.s32.totalorder %s74, %s77
      %p86 = scmp.eq.s32.totalorder %s27, 1
      %p87 = por %p85, %p86
      %p88 = scmp.ne.s32.totalorder %s77, %s78
      %p89 = scmp.eq.s32.totalorder %s27, 0
      %p90 = por %p88, %p89
      %p91 = scmp.ne.s32.totalorder %s77, %s78
      %p92 = scmp.eq.s32.totalorder %s28, 1
      %p93 = por %p91, %p92
      %p95 = scmp.ne.s32.totalorder %s78, %s94
      %p96 = scmp.eq.s32.totalorder %s28, 0
      %p97 = por %p95, %p96
      %p98 = scmp.le.s32.totalorder 1, %s22
      %p99 = scmp.lt.s32.totalorder %s22, 3
      %p100 = pnand %p98, %p99
      %p101 = pneg %p100
      // Predicated region
      $region9: #{tpu_custom_call.1} parent=5 // pred_check
        _
      $region10: #{tpu_custom_call.1} parent=5 // pred_check_branch
        %103 = sbr.rel (%p100) target = $region12
      $region11: #{tpu_custom_call.1} parent=5 // pred_region
        %s104 = ssub.s32 %s22, 1
      $region12: #{tpu_custom_call.1} parent=5 // pred_fallthru
        _
      %p105 = scmp.lt.s32.totalorder %s22, 2
      // Predicated region
      $region13: #{tpu_custom_call.1} parent=5 // pred_check
        %p106 = pneg %p105
      $region14: #{tpu_custom_call.1} parent=5 // pred_check_branch
        %108 = sbr.rel (%p106) target = $region16
      $region15: #{tpu_custom_call.1} parent=5 // pred_region
        // Predicated region
        $region17: #{tpu_custom_call.1} parent=15 // pred_check
          %p109 = pneg %p56
        $region18: #{tpu_custom_call.1} parent=15 // pred_check_branch
          %111 = sbr.rel (%p109) target = $region20
        $region19: #{tpu_custom_call.1} parent=15 // pred_region
          %s112 = sand.u32 %s46, 1
          %s113 = scalar_lea.sflag [#allocation5], %s112
          %s114 = sand.u32 %s46, 1
          %s115 = smul.addr %s114, 8
          %s116 = scalar_lea.vmem [#allocation4], %s115
          %118 = vsyncadd %s113, 0
          %s119 = smul.addr %s30, 4
          %s120 = sadd.s32 %s29, %s119
          %s121 = smul.addr %s120, 2
          %s122 = scalar_lea.hbm %s1, %s121
          %s123 = sshll.u32 %s122, 4
          %s124 = int_to_ptr.hbm [resolvable:$true] %s123
          %s125 = sshll.u32 %s116, 4
          %s126 = int_to_ptr.vmem [resolvable:$true] %s125
          %131 = dma.hbm_to_vmem [thread:$0]  %s124, 128, %s126, %s113, 32, 32, 2
        $region20: #{tpu_custom_call.1} parent=15 // pred_fallthru
          _
      $region16: #{tpu_custom_call.1} parent=5 // pred_fallthru
        _
      %p132 = scmp.le.s32.totalorder 1, %s22
      %p133 = scmp.lt.s32.totalorder %s22, 3
      %p134 = pnand %p132, %p133
      %p135 = pneg %p134
      // Predicated region
      $region21: #{tpu_custom_call.1} parent=5 // pred_check
        _
      $region22: #{tpu_custom_call.1} parent=5 // pred_check_branch
        %137 = sbr.rel (%p134) target = $region24
      $region23: #{tpu_custom_call.1} parent=5 // pred_region
        %s138 = ssub.s32 %s22, 1
        %s139 = sand.u32 %s49, 1
        %s140 = scalar_lea.sflag [#allocation5], %s139
        %s141 = sand.u32 %s49, 1
        %s142 = smul.addr %s141, 8
        %s143 = scalar_lea.vmem [#allocation4], %s142
        // Predicated region
        $region25: #{tpu_custom_call.1} parent=23 // pred_check
          %p144 = pneg %p62
        $region26: #{tpu_custom_call.1} parent=23 // pred_check_branch
          %146 = sbr.rel (%p144) target = $region28
        $region27: #{tpu_custom_call.1} parent=23 // pred_region
          %148 = dma.done %s140, 128
        $region28: #{tpu_custom_call.1} parent=23 // pred_fallthru
          _
        %s149 = sand.u32 %s49, 1
        %s150 = scalar_lea.sflag [#allocation5], %s149
        %s151 = sand.u32 %s49, 1
        %s152 = smul.addr %s151, 8
        %s153 = scalar_lea.vmem [#allocation4], %s152
        %p154 = pneg %p62
        %p155 = pneg %p59
        %p156 = pneg %p90
        %p157 = pneg %p87
        %s158 = sand.u32 %s77, 1
        %s159 = scalar_lea.sflag [#allocation6], %s158
        %s160 = sand.u32 %s77, 1
        %s161 = smul.addr %s160, 8
        %s162 = scalar_lea.vmem [#allocation7], %s161
        %s163 = smul.u32 %s32, 128
        %s164 = sld [smem:[#allocation3 + %s163]]
        %s165 = sadd.s32 %s163, 1
        %s166 = sld [smem:[#allocation3 + %s165]]
        %s167 = sadd.s32 %s163, 2
        %s168 = sld [smem:[#allocation3 + %s167]]
        %s169 = sadd.s32 %s163, 3
        %s170 = sld [smem:[#allocation3 + %s169]]
        %s171 = sadd.s32 %s163, 4
        %s172 = sld [smem:[#allocation3 + %s171]]
        %s173 = sadd.s32 %s163, 5
        %s174 = sld [smem:[#allocation3 + %s173]]
        %v175 = vlaneseq
        %v176 = vshrl.u32 %v175, 7
        %s177 = smul.u32 %s31, 2
        %v178 = vstv %s177
        %v179 = vadd.s32 %v176, %v178
        %v180 = vlaneseq
        %v181 = vand.u32 %v180, 127
        %v182 = vmul.u32 %v179, 128
        %v183 = vadd.s32 %v182, %v181
        %v184 = vcvt.s32.f32 %v183
        %v185 = vadd.f32 %v184, 0.5
        %v186 = vmul.f32 %v185, 0.0625
        %v187 = vfloor.f32 %v186
        %v188 = vcvt.f32.s32.to.zero.pseudo %v187
        %v189 = vmul.u32 %v188, 16
        %v190 = vsub.s32 %v183, %v189
        %vm191 = vcmp.lt.s32.totalorder %v190, 0
        %v192 = vsub.s32 %v188, 1
        %v193 = vsel %vm191, %v192, %v188
        %v194 = vadd.s32 %v190, 16
        %v195 = vsel %vm191, %v194, %v190
        %vm196 = vcmp.ge.s32.totalorder %v195, 16
        %v197 = vadd.s32 %v193, 1
        %v198 = vsel %vm196, %v197, %v193
        %v199 = vsub.s32 %v195, 16
        %v200 = vsel %vm196, %v199, %v195
        %v201 = vadd.s32 %v198, 4
        %v202 = vadd.s32 %v200, 4
        %s203 = scvt.s32.f32 %s164
        %s204 = scvt.s32.f32 %s170
        %v205 = vstv %s166
        %v206 = vsub.s32 %v201, %v205
        %v207 = vcvt.s32.f32 %v206
        %v208 = vadd.f32 %v207, 0.5
        %v209 = vstv %s203
        %v210 = vrcp.pop %v209
        %v211 = vmul.f32 %v209, %v210
        %v212 = vsub.f32 1.0, %v211
        %v213 = vmul.f32 %v210, %v212
        %v214 = vadd.f32 %v210, %v213
        %vm215 = vweird.f32 %v209
        %vm216 = vweird.f32 %v210
        %vm217 = vmor %vm215, %vm216
        %v218 = vsel %vm217, %v210, %v214
        %v219 = vand.u32 2147483647, %v209
        %vm220 = vcmp.eq.f32.partialorder %v219, 8.507059e+37
        %v221 = vand.u32 %v209, 2147483648
        %v222 = vor.u32 1.1754944e-38, %v221
        %v223 = vsel %vm220, %v222, %v218
        %v224 = vmul.f32 %v208, %v223
        %v225 = vfloor.f32 %v224
        %v226 = vmul.f32 %v225, %v209
        %v227 = vsub.f32 %v207, %v226
        %vm228 = vcmp.lt.f32.partialorder %v227, 0.0
        %v229 = vadd.f32 %v227, %v209
        %v230 = vsel %vm228, %v229, %v227
        %vm231 = vcmp.ge.f32.partialorder %v230, %v209
        %v232 = vsub.f32 %v230, %v209
        %v233 = vsel %vm231, %v232, %v230
        %vm234 = vcmp.ge.s32.totalorder %v206, 0
        %v235 = vstv %s204
        %vm236 = vcmp.lt.f32.partialorder %v233, %v235
        %vm237 = vmand %vm234, %vm236
        %v238 = vstv %s172
        %vm239 = vcmp.lt.s32.totalorder %v201, %v238
        %vm240 = vmand %vm237, %vm239
        %v241 = vstv %s168
        %v242 = vsub.s32 %v202, %v241
        %v243 = vcvt.s32.f32 %v242
        %v244 = vadd.f32 %v243, 0.5
        %v245 = vmul.f32 %v244, %v223
        %v246 = vfloor.f32 %v245
        %v247 = vmul.f32 %v246, %v209
        %v248 = vsub.f32 %v243, %v247
        %vm249 = vcmp.lt.f32.partialorder %v248, 0.0
        %v250 = vadd.f32 %v248, %v209
        %v251 = vsel %vm249, %v250, %v248
        %vm252 = vcmp.ge.f32.partialorder %v251, %v209
        %v253 = vsub.f32 %v251, %v209
        %v254 = vsel %vm252, %v253, %v251
        %vm255 = vcmp.ge.s32.totalorder %v242, 0
        %vm256 = vcmp.lt.f32.partialorder %v254, %v235
        %vm257 = vmand %vm255, %vm256
        %v258 = vstv %s174
        %vm259 = vcmp.lt.s32.totalorder %v202, %v258
        %vm260 = vmand %vm257, %vm259
        %vm261 = vmor %vm240, %vm260
        %vm262 = vmxor %vm261, 1
        %v263 = vsel %vm262, 1, 0
        %v264 = vcvt.s32.f32 %v263
        %v265 = vld [vmem:[%s143] sm:$0x3]
        %v266 = vld [vmem:[%s143 + $0x2] sm:$0x3]
        %v267 = vld [vmem:[%s143 + $0x4] sm:$0x3]
        %v268 = vld [vmem:[%s143 + $0x6] sm:$0x3]
        %v269 = vmul.f32 %v265, %v264
        %v270 = vmul.f32 %v266, %v264
        %v271 = vmul.f32 %v267, %v264
        %v272 = vmul.f32 %v268, %v264
        %273 = vst [vmem:[%s162] sm:$0x3] %v269
        %274 = vst [vmem:[%s162 + $0x2] sm:$0x3] %v270
        %275 = vst [vmem:[%s162 + $0x4] sm:$0x3] %v271
        %276 = vst [vmem:[%s162 + $0x6] sm:$0x3] %v272
        %s277 = sand.u32 %s77, 1
        %s278 = scalar_lea.sflag [#allocation6], %s277
        %s279 = sand.u32 %s77, 1
        %s280 = smul.addr %s279, 8
        %s281 = scalar_lea.vmem [#allocation7], %s280
        // Predicated region
        $region29: #{tpu_custom_call.1} parent=23 // pred_check
          %p282 = pneg %p87
        $region30: #{tpu_custom_call.1} parent=23 // pred_check_branch
          %284 = sbr.rel (%p282) target = $region32
        $region31: #{tpu_custom_call.1} parent=23 // pred_region
          %286 = vsyncadd %s278, 0
          %s287 = smul.addr %s32, 4
          %s288 = sadd.s32 %s31, %s287
          %s289 = smul.addr %s288, 2
          %s290 = scalar_lea.hbm %s2, %s289
          %s291 = sshll.u32 %s281, 4
          %s292 = int_to_ptr.vmem [resolvable:$true] %s291
          %s293 = sshll.u32 %s290, 4
          %s294 = int_to_ptr.hbm [resolvable:$true] %s293
          %299 = dma.vmem_to_hbm [thread:$0]  %s292, 128, %s294, %s278, 32, 32, 2
        $region32: #{tpu_custom_call.1} parent=23 // pred_fallthru
          _
      $region24: #{tpu_custom_call.1} parent=5 // pred_fallthru
        _
      %p300 = scmp.le.s32.totalorder 2, %s22
      // Predicated region
      $region33: #{tpu_custom_call.1} parent=5 // pred_check
        %p301 = pneg %p300
      $region34: #{tpu_custom_call.1} parent=5 // pred_check_branch
        %303 = sbr.rel (%p301) target = $region36
      $region35: #{tpu_custom_call.1} parent=5 // pred_region
        %s304 = ssub.s32 %s22, 2
        // Predicated region
        $region37: #{tpu_custom_call.1} parent=35 // pred_check
          %p305 = pneg %p93
        $region38: #{tpu_custom_call.1} parent=35 // pred_check_branch
          %307 = sbr.rel (%p305) target = $region40
        $region39: #{tpu_custom_call.1} parent=35 // pred_region
          %s308 = sand.u32 %s78, 1
          %s309 = scalar_lea.sflag [#allocation6], %s308
          %s310 = sand.u32 %s78, 1
          %s311 = smul.addr %s310, 8
          %s312 = scalar_lea.vmem [#allocation7], %s311
          %314 = dma.done %s309, 128
        $region40: #{tpu_custom_call.1} parent=35 // pred_fallthru
          _
      $region36: #{tpu_custom_call.1} parent=5 // pred_fallthru
        _
    $region6: #{tpu_custom_call.1} parent=1 // loop_footer
      %s26 = sadd.s32 1, %s22
    $region7: #{tpu_custom_call.1} parent=1 // loop_footer_branch
      %21 = sbr.rel target = $region3
    $region8: #{tpu_custom_call.1} parent=1 // loop_exit
      _
    %315 = vsyncpa [#allocation5], 1
    %s316 = scalar_lea.sflag [#allocation5], 1
    %317 = vsyncpa %s316, 1
    %318 = vsyncpa [#allocation6], 1
    %s319 = scalar_lea.sflag [#allocation6], 1
    %320 = vsyncpa %s319, 1

</llo_original>
